<compile_context>
chip_gen: v6e
topology: v6e:2x2x1
jax: 0.10.0
libtpu: 0.0.40
codegen_flags: <defaults>
</compile_context>

<pallas_src>
import jax
import jax.numpy as jnp
from jax.experimental import pallas as pl
from jax.experimental.pallas import tpu as pltpu


# Folded tanh-GELU constants: gelu(x) ~= 0.5*x*(1 + tanh(x*(C1 + C2*x*x)))
_GELU_C1 = 0.7978845608028654            # sqrt(2/pi)
_GELU_C2 = 0.7978845608028654 * 0.044715


def _gelu_tanh(x):
    # TODO(synk): PyTorch nn.GELU() default is the exact erf formulation; the
    # tanh approximation matches to ~1e-3 and lowers cleanly on the TPU EUP.
    inner = x * (_GELU_C1 + _GELU_C2 * x * x)
    return 0.5 * x * (1.0 + jnp.tanh(inner))


def _ffn_kernel(x_ref, w1_ref, b1_ref, w2_ref, b2_ref, o_ref, acc_ref):
    """One (tm, dim) row block of: out = gelu(x @ W1 + b1) @ W2 + b2.

    Grid = (row blocks, hidden blocks). The hidden axis is the reduction axis
    of the second matmul, so the f32 accumulator lives in VMEM scratch across
    it and the hidden activation never round-trips to HBM.
    """
    h_idx = pl.program_id(1)

    @pl.when(h_idx == 0)
    def _():
        acc_ref[...] = jnp.zeros_like(acc_ref)

    # First matmul: bf16 operands, f32 accumulation on the MXU; bias + GELU in f32.
    h = jnp.dot(x_ref[...], w1_ref[...], preferred_element_type=jnp.float32)
    h = _gelu_tanh(h + b1_ref[...])

    # Second matmul: cast the activation back to the compute dtype so the MXU
    # runs at bf16 rate; accumulate partial products over hidden slices in f32.
    acc_ref[...] += jnp.dot(
        h.astype(w2_ref.dtype), w2_ref[...], preferred_element_type=jnp.float32
    )

    @pl.when(h_idx == pl.num_programs(1) - 1)
    def _():
        o_ref[...] = (acc_ref[...] + b2_ref[...]).astype(o_ref.dtype)


def _round_up(v, m):
    return ((v + m - 1) // m) * m


def _hidden_tile_candidates(hidden, max_th):
    """(th, hidden_pad) candidates, largest first.

    Zero-padding the hidden dim of W1 / b1 / W2 is exact: padded units produce
    gelu(0) = 0 and therefore contribute nothing to the second matmul.
    """
    cands = []
    if hidden <= max_th:
        cands.append((hidden, hidden))
    for t in range(max_th, 255, -128):          # multiple-of-128 exact divisors
        if t < hidden and hidden % t == 0:
            cands.append((t, hidden))
    for t in (512, 256, 128):                   # zero-padded fallback
        cands.append((t, _round_up(hidden, t)))
    return cands


def _footprint_bytes(tm, th, dim, cbytes, obytes):
    """VMEM footprint: double-buffered blocks + f32 accumulator scratch."""
    dbuf = 2 * (
        tm * dim * cbytes     # x block
        + dim * th * cbytes   # W1 block
        + th * 4              # b1 block (f32)
        + th * dim * cbytes   # W2 block
        + dim * 4             # b2 block (f32)
        + tm * dim * obytes   # out block
    )
    return dbuf + tm * dim * 4


def feed_forward(x, w1, b1, w2, b2, *, tm=512, max_th=1024,
                 compute_dtype=jnp.bfloat16,
                 vmem_budget_bytes=44 * 1024 * 1024):
    """Fused Pallas FFN matching the PyTorch module's forward pass (dropout=0).

    TODO(synk): for dim >= 8192 on v7x (64 MiB VMEM) an additional output-dim
    tile axis would be needed; current tiling covers typical transformer dims.
    """
    orig_shape = x.shape
    out_dtype = x.dtype
    dim = orig_shape[-1]
    hidden = w1.shape[1]
    assert w1.shape == (dim, hidden)
    assert b1.shape == (hidden,)
    assert w2.shape == (hidden, dim)
    assert b2.shape == (dim,)

    x2 = x.reshape(-1, dim)
    m = x2.shape[0]

    # Rows: pad only to a multiple of 8 (sublane). The last row block may be
    # ragged (pl.cdiv grid); out-of-range rows are masked on the output store,
    # so no full-tile padding copy of the activation tensor is needed.
    m_pad = _round_up(m, 8)
    if m_pad != m:
        x2 = jnp.pad(x2, ((0, m_pad - m), (0, 0)))
    tm_eff = max(8, (min(tm, m_pad) // 8) * 8)

    cbytes = jnp.dtype(compute_dtype).itemsize
    obytes = jnp.dtype(out_dtype).itemsize

    # Pick the largest hidden tile (and if needed a smaller row tile) that fits
    # the VMEM budget with double-buffered blocks. Row tile is shrunk last,
    # since arithmetic intensity on the streamed weights scales with tm.
    th_cands = _hidden_tile_candidates(hidden, max_th)
    th_eff, hidden_pad = th_cands[-1]
    found = False
    while not found:
        for th_c, hp_c in th_cands:
            if _footprint_bytes(tm_eff, th_c, dim, cbytes, obytes) <= vmem_budget_bytes:
                th_eff, hidden_pad, found = th_c, hp_c, True
                break
        if not found:
            if tm_eff > 128:
                tm_eff = max(128, tm_eff - 128)
            else:
                th_eff, hidden_pad = th_cands[-1]
                break

    if hidden_pad != hidden:
        pad_h = hidden_pad - hidden
        w1 = jnp.pad(w1, ((0, 0), (0, pad_h)))
        b1 = jnp.pad(b1, ((0, pad_h),))
        w2 = jnp.pad(w2, ((0, pad_h), (0, 0)))

    # bf16 operands (halves weight DMA, runs the MXU at bf16 rate); biases f32.
    x2c = x2.astype(compute_dtype)
    w1c = w1.astype(compute_dtype)
    w2c = w2.astype(compute_dtype)
    b1_2d = b1.reshape(1, hidden_pad).astype(jnp.float32)
    b2_2d = b2.reshape(1, dim).astype(jnp.float32)

    grid = (pl.cdiv(m_pad, tm_eff), hidden_pad // th_eff)

    footprint = _footprint_bytes(tm_eff, th_eff, dim, cbytes, obytes)
    vmem_limit = int(min(max(footprint + (16 << 20), 32 << 20), 64 << 20))

    out2 = pl.pallas_call(
        _ffn_kernel,
        out_shape=jax.ShapeDtypeStruct((m_pad, dim), out_dtype),
        grid_spec=pltpu.PrefetchScalarGridSpec(
            num_scalar_prefetch=0,
            grid=grid,
            in_specs=[
                pl.BlockSpec((tm_eff, dim), lambda i, h: (i, 0)),   # x rows
                pl.BlockSpec((dim, th_eff), lambda i, h: (0, h)),   # W1 slice
                pl.BlockSpec((1, th_eff), lambda i, h: (0, h)),     # b1 slice
                pl.BlockSpec((th_eff, dim), lambda i, h: (h, 0)),   # W2 slice
                pl.BlockSpec((1, dim), lambda i, h: (0, 0)),        # b2
            ],
            out_specs=pl.BlockSpec((tm_eff, dim), lambda i, h: (i, 0)),
            scratch_shapes=[pltpu.VMEM((tm_eff, dim), jnp.float32)],
        ),
        compiler_params=pltpu.CompilerParams(
            # Row blocks are independent (megacore-shardable on v7x); the
            # hidden axis carries the second-matmul accumulator.
            dimension_semantics=("parallel", "arbitrary"),
            vmem_limit_bytes=vmem_limit,
        ),
    )(x2c, w1c, b1_2d, w2c, b2_2d)

    if m_pad != m:
        out2 = out2[:m]
    return out2.reshape(orig_shape)


if __name__ == "__main__":
    key = jax.random.PRNGKey(0)
    batch, seq, dim, hidden = 2, 8, 32, 64
    k1, k2, k3, k4, k5 = jax.random.split(key, 5)

    x = jax.random.normal(k1, (batch, seq, dim), dtype=jnp.float32)
    w1 = jax.random.normal(k2, (dim, hidden), dtype=jnp.float32) * 0.1
    b1 = jax.random.normal(k3, (hidden,), dtype=jnp.float32) * 0.1
    w2 = jax.random.normal(k4, (hidden, dim), dtype=jnp.float32) * 0.1
    b2 = jax.random.normal(k5, (dim,), dtype=jnp.float32) * 0.1

    y = feed_forward(x, w1, b1, w2, b2)
    y = jax.block_until_ready(y)

    # Reference replicating the kernel numerics (bf16 operands, f32 accumulate).
    bf = lambda a: a.astype(jnp.bfloat16).astype(jnp.float32)
    h_b = _gelu_tanh(
        jnp.dot(bf(x), bf(w1), precision=jax.lax.Precision.HIGHEST) + b1)
    y_bf_ref = jnp.dot(bf(h_b), bf(w2), precision=jax.lax.Precision.HIGHEST) + b2

    # Full-f32 reference (module semantics, dropout p=0).
    h_f = _gelu_tanh(jnp.dot(x, w1, precision=jax.lax.Precision.HIGHEST) + b1)
    y_f32_ref = jnp.dot(h_f, w2, precision=jax.lax.Precision.HIGHEST) + b2

    assert y.shape == x.shape and y.dtype == x.dtype
    assert jnp.max(jnp.abs(y - y_bf_ref)) < 1e-2
    assert jnp.max(jnp.abs(y - y_f32_ref)) < 3e-2

    print("KERNEL_OK")
</pallas_src>

<mosaic_0001>
module attributes {stable_mosaic.version = 11 : i64} {
  func.func @_ffn_kernel(%arg0: i32, %arg1: i32, %arg2: memref<16x32xbf16, #tpu.memory_space<vmem>>, %arg3: memref<32x64xbf16, #tpu.memory_space<vmem>>, %arg4: memref<1x64xf32, #tpu.memory_space<vmem>>, %arg5: memref<64x32xbf16, #tpu.memory_space<vmem>>, %arg6: memref<1x32xf32, #tpu.memory_space<vmem>>, %arg7: memref<16x32xf32, #tpu.memory_space<vmem>>, %arg8: memref<16x32xf32, #tpu.memory_space<vmem>>) attributes {dimension_semantics = [#tpu.dimension_semantics<parallel>, #tpu.dimension_semantics<arbitrary>], iteration_bounds = array<i64: 1, 1>, scalar_prefetch = 0 : i64, scratch_operands = 1 : i64, tpu.core_type = #tpu.core_type<tc>, window_params = [{transform_indices = @transform_0, window_bounds = array<i64: 16, 32>}, {transform_indices = @transform_1, window_bounds = array<i64: 32, 64>}, {transform_indices = @transform_2, window_bounds = array<i64: 1, 64>}, {transform_indices = @transform_3, window_bounds = array<i64: 64, 32>}, {pipeline_mode = #tpu.pipeline_mode<synchronous>, transform_indices = @transform_4, window_bounds = array<i64: 1, 32>}, {transform_indices = @transform_5, window_bounds = array<i64: 16, 32>}]} {
    %c0_i32 = arith.constant 0 : i32
    %0 = arith.cmpi eq, %arg1, %c0_i32 : i32
    %1 = arith.extui %0 : i1 to i32
    %c0_i32_0 = arith.constant 0 : i32
    %2 = arith.cmpi ne, %1, %c0_i32_0 : i32
    scf.if %2 {
      %cst_19 = arith.constant 0.000000e+00 : f32
      %30 = vector.broadcast %cst_19 : f32 to vector<16x32xf32>
      %c0_20 = arith.constant 0 : index
      %c0_21 = arith.constant 0 : index
      %31 = vector.load %arg8[%c0_20, %c0_21] : memref<16x32xf32, #tpu.memory_space<vmem>>, vector<16x32xf32>
      tpu.vector_store %arg8[%c0_20, %c0_21], %30 {strides = array<i32>} : memref<16x32xf32, #tpu.memory_space<vmem>>, vector<16x32xf32>,
    } else {
    }
    %c0 = arith.constant 0 : index
    %c0_1 = arith.constant 0 : index
    %3 = vector.load %arg2[%c0, %c0_1] : memref<16x32xbf16, #tpu.memory_space<vmem>>, vector<16x32xbf16>
    %c0_2 = arith.constant 0 : index
    %c0_3 = arith.constant 0 : index
    %4 = vector.load %arg3[%c0_2, %c0_3] : memref<32x64xbf16, #tpu.memory_space<vmem>>, vector<32x64xbf16>
    %cst = arith.constant dense<0.000000e+00> : vector<16x64xf32>
    %5 = tpu.matmul %3, %4, %cst {dimension_numbers = #tpu.dot_dimension_numbers<[1], [0], [0], [1], [0, 0, 1, 1], [], []>} : vector<16x32xbf16>, vector<32x64xbf16>, vector<16x64xf32> -> vector<16x64xf32>
    %c0_4 = arith.constant 0 : index
    %c0_5 = arith.constant 0 : index
    %6 = vector.load %arg4[%c0_4, %c0_5] : memref<1x64xf32, #tpu.memory_space<vmem>>, vector<1x64xf32>
    %7 = vector.broadcast %6 : vector<1x64xf32> to vector<16x64xf32>
    %8 = arith.addf %5, %7 : vector<16x64xf32>
    %cst_6 = arith.constant 0.0356774069 : f32
    %9 = vector.broadcast %cst_6 : f32 to vector<16x64xf32>
    %10 = arith.mulf %9, %8 : vector<16x64xf32>
    %11 = arith.mulf %10, %8 : vector<16x64xf32>
    %cst_7 = arith.constant 0.797884583 : f32
    %12 = vector.broadcast %cst_7 : f32 to vector<16x64xf32>
    %13 = arith.addf %12, %11 : vector<16x64xf32>
    %14 = arith.mulf %8, %13 : vector<16x64xf32>
    %cst_8 = arith.constant 5.000000e-01 : f32
    %15 = vector.broadcast %cst_8 : f32 to vector<16x64xf32>
    %16 = arith.mulf %15, %8 : vector<16x64xf32>
    %17 = math.tanh %14 : vector<16x64xf32>
    %cst_9 = arith.constant 1.000000e+00 : f32
    %18 = vector.broadcast %cst_9 : f32 to vector<16x64xf32>
    %19 = arith.addf %18, %17 : vector<16x64xf32>
    %20 = arith.mulf %16, %19 : vector<16x64xf32>
    %c0_10 = arith.constant 0 : index
    %c0_11 = arith.constant 0 : index
    %21 = vector.load %arg8[%c0_10, %c0_11] : memref<16x32xf32, #tpu.memory_space<vmem>>, vector<16x32xf32>
    %22 = arith.truncf %20 : vector<16x64xf32> to vector<16x64xbf16>
    %c0_12 = arith.constant 0 : index
    %c0_13 = arith.constant 0 : index
    %23 = vector.load %arg5[%c0_12, %c0_13] : memref<64x32xbf16, #tpu.memory_space<vmem>>, vector<64x32xbf16>
    %cst_14 = arith.constant dense<0.000000e+00> : vector<16x32xf32>
    %24 = tpu.matmul %22, %23, %cst_14 {dimension_numbers = #tpu.dot_dimension_numbers<[1], [0], [0], [1], [0, 0, 1, 1], [], []>} : vector<16x64xbf16>, vector<64x32xbf16>, vector<16x32xf32> -> vector<16x32xf32>
    %25 = arith.addf %21, %24 : vector<16x32xf32>
    %c0_15 = arith.constant 0 : index
    %c0_16 = arith.constant 0 : index
    %26 = vector.load %arg8[%c0_15, %c0_16] : memref<16x32xf32, #tpu.memory_space<vmem>>, vector<16x32xf32>
    tpu.vector_store %arg8[%c0_15, %c0_16], %25 {strides = array<i32>} : memref<16x32xf32, #tpu.memory_space<vmem>>, vector<16x32xf32>,
    %c0_i32_17 = arith.constant 0 : i32
    %27 = arith.cmpi eq, %arg1, %c0_i32_17 : i32
    %28 = arith.extui %27 : i1 to i32
    %c0_i32_18 = arith.constant 0 : i32
    %29 = arith.cmpi ne, %28, %c0_i32_18 : i32
    scf.if %29 {
      %c0_19 = arith.constant 0 : index
      %c0_20 = arith.constant 0 : index
      %30 = vector.load %arg8[%c0_19, %c0_20] : memref<16x32xf32, #tpu.memory_space<vmem>>, vector<16x32xf32>
      %c0_21 = arith.constant 0 : index
      %c0_22 = arith.constant 0 : index
      %31 = vector.load %arg6[%c0_21, %c0_22] : memref<1x32xf32, #tpu.memory_space<vmem>>, vector<1x32xf32>
      %32 = vector.broadcast %31 : vector<1x32xf32> to vector<16x32xf32>
      %33 = arith.addf %30, %32 : vector<16x32xf32>
      %c0_23 = arith.constant 0 : index
      %c0_24 = arith.constant 0 : index
      %34 = vector.load %arg7[%c0_23, %c0_24] : memref<16x32xf32, #tpu.memory_space<vmem>>, vector<16x32xf32>
      tpu.vector_store %arg7[%c0_23, %c0_24], %33 {strides = array<i32>} : memref<16x32xf32, #tpu.memory_space<vmem>>, vector<16x32xf32>,
    } else {
    }
    return
  }
  func.func @transform_0(%arg0: i32, %arg1: i32) -> (i32, i32) {
    %c0_i32 = arith.constant 0 : i32
    %c0_i32_0 = arith.constant 0 : i32
    return %arg0, %c0_i32 : i32, i32
  }
  func.func @transform_1(%arg0: i32, %arg1: i32) -> (i32, i32) {
    %c0_i32 = arith.constant 0 : i32
    %c0_i32_0 = arith.constant 0 : i32
    return %c0_i32, %arg1 : i32, i32
  }
  func.func @transform_2(%arg0: i32, %arg1: i32) -> (i32, i32) {
    %c0_i32 = arith.constant 0 : i32
    %c0_i32_0 = arith.constant 0 : i32
    return %c0_i32, %arg1 : i32, i32
  }
  func.func @transform_3(%arg0: i32, %arg1: i32) -> (i32, i32) {
    %c0_i32 = arith.constant 0 : i32
    %c0_i32_0 = arith.constant 0 : i32
    return %arg1, %c0_i32 : i32, i32
  }
  func.func @transform_4(%arg0: i32, %arg1: i32) -> (i32, i32) {
    %c0_i32 = arith.constant 0 : i32
    %c0_i32_0 = arith.constant 0 : i32
    %c0_i32_1 = arith.constant 0 : i32
    return %c0_i32, %c0_i32_0 : i32, i32
  }
  func.func @transform_5(%arg0: i32, %arg1: i32) -> (i32, i32) {
    %c0_i32 = arith.constant 0 : i32
    %c0_i32_0 = arith.constant 0 : i32
    return %arg0, %c0_i32 : i32, i32
  }
}

</mosaic_0001>

<llo_original>
// kernel: tpu_custom_call.1
$region0: #{tpu_custom_call.1}
  #allocation0 [shape = 'u32[]', space=smem, size = 0x4, offset = 0x4, fixed_abs, tag = 'smem constant byte address 0x4 - core index']
  #allocation1 [shape = 'u32[144,128]{1,0:T(1,128)}', space=vmem, size = 0x12000, scoped, tag = 'internal scratch']
  #allocation2 [shape = 'f32[16,32]{1,0:T(8,128)}', space=vmem, size = 0x2000, scoped, tag = 'scratch operand']
  %s0 = inlined_call_operand.vmem [shape: bf16[16,32], index: 0, kind: input, shape index: {}]
  %s1 = inlined_call_operand.vmem [shape: bf16[32,64], index: 1, kind: input, shape index: {}]
  %s2 = inlined_call_operand.vmem [shape: f32[1,64], index: 2, kind: input, shape index: {}]
  %s3 = inlined_call_operand.vmem [shape: bf16[64,32], index: 3, kind: input, shape index: {}]
  %s4 = inlined_call_operand.vmem [shape: f32[1,32], index: 4, kind: input, shape index: {}]
  %s5 = inlined_call_operand.hbm [shape: f32[16,32], index: 5, kind: output, shape index: {}]
  %s6 = sld [smem:[#allocation0]]
  $region38: #{tpu_custom_call.1} parent=0
    _
  %s8 = ssub.s32 1, %s6
  %s9 = scalar_select 0, %s8, %s6
  $region1: #{tpu_custom_call.1} parent=0
    #allocation3 [shape = 'u8[8192]{0}', space=vmem, size = 0x2000, scoped, tag = 'output window, operand 0, single buffered']
    #allocation4 [shape = 's32[1]{0}', space=sflag, size = 0x4, scoped, tag = 'scoped memory for tpu_custom_call.1']
    %10 = vsyncpa [#allocation4], 0
    // Predicated region
    $region2: #{tpu_custom_call.1} parent=1 // pred_check
      _
    $region3: #{tpu_custom_call.1} parent=1 // pred_check_branch
      %12 = sbr.rel (0) target = $region5
    $region4: #{tpu_custom_call.1} parent=1 // pred_region
      _
    $region5: #{tpu_custom_call.1} parent=1 // pred_fallthru
      _
    // Predicated region
    $region6: #{tpu_custom_call.1} parent=1 // pred_check
      _
    $region7: #{tpu_custom_call.1} parent=1 // pred_check_branch
      %14 = sbr.rel (0) target = $region9
    $region8: #{tpu_custom_call.1} parent=1 // pred_region
      _
    $region9: #{tpu_custom_call.1} parent=1 // pred_fallthru
      _
    // Predicated region
    $region10: #{tpu_custom_call.1} parent=1 // pred_check
      _
    $region11: #{tpu_custom_call.1} parent=1 // pred_check_branch
      %16 = sbr.rel (0) target = $region13
    $region12: #{tpu_custom_call.1} parent=1 // pred_region
      _
    $region13: #{tpu_custom_call.1} parent=1 // pred_fallthru
      _
    // Predicated region
    $region14: #{tpu_custom_call.1} parent=1 // pred_check
      _
    $region15: #{tpu_custom_call.1} parent=1 // pred_check_branch
      %18 = sbr.rel (0) target = $region17
    $region16: #{tpu_custom_call.1} parent=1 // pred_region
      _
    $region17: #{tpu_custom_call.1} parent=1 // pred_fallthru
      _
    // Predicated region
    $region18: #{tpu_custom_call.1} parent=1 // pred_check
      _
    $region19: #{tpu_custom_call.1} parent=1 // pred_check_branch
      %20 = sbr.rel (0) target = $region21
    $region20: #{tpu_custom_call.1} parent=1 // pred_region
      _
    $region21: #{tpu_custom_call.1} parent=1 // pred_fallthru
      _
    %p22 = scmp.eq.s32.totalorder 0, 0
    // Predicated region
    $region22: #{tpu_custom_call.1} parent=1 // pred_check
      %p23 = pneg %p22
    $region23: #{tpu_custom_call.1} parent=1 // pred_check_branch
      %25 = sbr.rel (%p23) target = $region25
    $region24: #{tpu_custom_call.1} parent=1 // pred_region
      %vm26 = vcmask 261120
      %27 = vst.msk [vmem:[#allocation2] sm:$0xff] %vm26, 0.0
      %28 = vst.msk [vmem:[#allocation2 + $0x8] sm:$0xff] %vm26, 0.0
    $region25: #{tpu_custom_call.1} parent=1 // pred_fallthru
      _
    %v29 = vld [vmem:[%s0] sm:$0xf]
    %v30 = vld [vmem:[%s0 + $0x4] sm:$0xf]
    %v31 = vld [vmem:[%s1] sm:$0xf]
    %v32 = vld [vmem:[%s1 + $0x4] sm:$0xf]
    %v33 = vld [vmem:[%s1 + $0x8] sm:$0xf]
    %v34 = vld [vmem:[%s1 + $0xc] sm:$0xf]
    %v35 = vld [vmem:[%s2] sm:$0x1]
    %v37 = vlaneseq
    %v38 = vshrl.u32 %v37, 7
    %v39 = vsub.s32 0, %v38
    %v40 = vrot.slane %v35, %v39
    %v44 = vunpack.c.l.b16 %v29
    %v45 = vunpack.c.l.b16 %v30
    %v46 = vpack.c.b16 %v45, %v44
    %v51 = vunpack.c.l.b16 %v31
    %v52 = vunpack.c.l.b16 %v32
    %v53 = vunpack.c.l.b16 %v33
    %v54 = vunpack.c.l.b16 %v34
    %v55 = vpack.c.b16 %v52, %v51
    %v56 = vpack.c.b16 %v54, %v53
    %vm59 = vcmask 261120
    %v61 = vsel %vm59, %v46, 0
    %63 = vmatprep.subr.bf16.mxu0 0
    %64 = vmatpush1.bf16.msra.mxu0 0
    %65 = vmatprep.subr.bf16.mxu0 0
    %66 = vmatpush1.bf16.msra.mxu0 0
    %67 = vmatprep.subr.bf16.mxu0 0
    %68 = vmatpush1.bf16.msra.mxu0 0
    %69 = vmatprep.subr.bf16.mxu0 0
    %70 = vmatpush1.bf16.msra.mxu0 0
    %71 = vmatprep.subr.bf16.mxu0 0
    %72 = vmatpush1.bf16.msra.mxu0 0
    %73 = vmatprep.subr.bf16.mxu0 0
    %74 = vmatpush1.bf16.msra.mxu0 0
    %75 = vmatprep.subr.bf16.mxu0 0
    %76 = vmatpush1.bf16.msra.mxu0 %v56
    %77 = vmatprep.subr.bf16.mxu0 0
    %78 = vmatpush1.bf16.msra.mxu0 %v55
    %79 = vmatprep.subr.bf16.mxu0 0
    %80 = vmatpush2.bf16.msra.mxu0 0
    %81 = vmatprep.subr.bf16.mxu0 0
    %82 = vmatpush2.bf16.msra.mxu0 0
    %83 = vmatprep.subr.bf16.mxu0 0
    %84 = vmatpush2.bf16.msra.mxu0 0
    %85 = vmatprep.subr.bf16.mxu0 0
    %86 = vmatpush2.bf16.msra.mxu0 0
    %87 = vmatprep.subr.bf16.mxu0 0
    %88 = vmatpush2.bf16.msra.mxu0 0
    %89 = vmatprep.subr.bf16.mxu0 0
    %90 = vmatpush2.bf16.msra.mxu0 0
    %91 = vmatprep.subr.bf16.mxu0 0
    %92 = vmatpush2.bf16.msra.mxu0 0
    %93 = vmatprep.subr.bf16.mxu0 0
    %94 = vmatpush2.bf16.msra.mxu0 0
    %95 = vmatprep.mubr.bf16.mxu0 0
    %96 = vmatmul.mubr.bf16.gmra.mxu0 %v61
    %v97 = vpop.f32.mrf.mxu0
    %v98 = vadd.f32 %v40, %v97
    %v99 = vpop.f32.mrf.mxu0
    %v100 = vpop.f32.mrf.mxu0
    %v101 = vadd.f32 %v40, %v100
    %v102 = vpop.f32.mrf.mxu0
    %103 = vdwg.mxu0
    %v104 = vmul.f32 %v98, 0.035677407
    %v105 = vmul.f32 %v101, 0.035677407
    %v106 = vmul.f32 %v104, %v98
    %v107 = vmul.f32 %v105, %v101
    %v108 = vadd.f32 %v106, 0.7978846
    %v109 = vadd.f32 %v107, 0.7978846
    %v110 = vmul.f32 %v98, %v108
    %v111 = vmul.f32 %v101, %v109
    %v112 = vmul.f32 %v98, 0.5
    %v113 = vmul.f32 %v101, 0.5
    %v114 = vtanh.pop %v110
    %v115 = vtanh.pop %v111
    %v116 = vadd.f32 %v114, 1.0
    %v117 = vadd.f32 %v115, 1.0
    %v118 = vmul.f32 %v112, %v116
    %v119 = vmul.f32 %v113, %v117
    %v120 = vld [vmem:[#allocation2] sm:$0xff]
    %v121 = vld [vmem:[#allocation2 + $0x8] sm:$0xff]
    %v122 = vpack.c.bf16 %v119, %v118
    %v123 = vld [vmem:[%s3] sm:$0xf]
    %v124 = vld [vmem:[%s3 + $0x4] sm:$0xf]
    %v125 = vld [vmem:[%s3 + $0x8] sm:$0xf]
    %v126 = vld [vmem:[%s3 + $0xc] sm:$0xf]
    %v127 = vld [vmem:[%s3 + $0x10] sm:$0xf]
    %v128 = vld [vmem:[%s3 + $0x14] sm:$0xf]
    %v129 = vld [vmem:[%s3 + $0x18] sm:$0xf]
    %v130 = vld [vmem:[%s3 + $0x1c] sm:$0xf]
    %v139 = vunpack.c.l.b16 %v123
    %v140 = vunpack.c.l.b16 %v124
    %v141 = vunpack.c.l.b16 %v125
    %v142 = vunpack.c.l.b16 %v126
    %v143 = vunpack.c.l.b16 %v127
    %v144 = vunpack.c.l.b16 %v128
    %v145 = vunpack.c.l.b16 %v129
    %v146 = vunpack.c.l.b16 %v130
    %v147 = vpack.c.b16 %v140, %v139
    %v148 = vpack.c.b16 %v142, %v141
    %v149 = vpack.c.b16 %v144, %v143
    %v150 = vpack.c.b16 %v146, %v145
    %vm155 = vcmask 523264
    %v157 = vsel %vm155, %v122, 0
    %159 = vmatprep.subr.bf16.mxu0 0
    %160 = vmatpush1.bf16.msra.mxu0 0
    %161 = vmatprep.subr.bf16.mxu0 0
    %162 = vmatpush1.bf16.msra.mxu0 0
    %163 = vmatprep.subr.bf16.mxu0 0
    %164 = vmatpush1.bf16.msra.mxu0 0
    %165 = vmatprep.subr.bf16.mxu0 0
    %166 = vmatpush1.bf16.msra.mxu0 0
    %167 = vmatprep.subr.bf16.mxu0 0
    %168 = vmatpush1.bf16.msra.mxu0 %v150
    %169 = vmatprep.subr.bf16.mxu0 0
    %170 = vmatpush1.bf16.msra.mxu0 %v149
    %171 = vmatprep.subr.bf16.mxu0 0
    %172 = vmatpush1.bf16.msra.mxu0 %v148
    %173 = vmatprep.subr.bf16.mxu0 0
    %174 = vmatpush1.bf16.msra.mxu0 %v147
    %175 = vmatprep.subr.bf16.mxu0 0
    %176 = vmatpush2.bf16.msra.mxu0 0
    %177 = vmatprep.subr.bf16.mxu0 0
    %178 = vmatpush2.bf16.msra.mxu0 0
    %179 = vmatprep.subr.bf16.mxu0 0
    %180 = vmatpush2.bf16.msra.mxu0 0
    %181 = vmatprep.subr.bf16.mxu0 0
    %182 = vmatpush2.bf16.msra.mxu0 0
    %183 = vmatprep.subr.bf16.mxu0 0
    %184 = vmatpush2.bf16.msra.mxu0 0
    %185 = vmatprep.subr.bf16.mxu0 0
    %186 = vmatpush2.bf16.msra.mxu0 0
    %187 = vmatprep.subr.bf16.mxu0 0
    %188 = vmatpush2.bf16.msra.mxu0 0
    %189 = vmatprep.subr.bf16.mxu0 0
    %190 = vmatpush2.bf16.msra.mxu0 0
    %191 = vmatprep.mubr.bf16.mxu0 0
    %192 = vmatmul.mubr.bf16.gmra.mxu0 %v157
    %v193 = vpop.f32.mrf.mxu0
    %v194 = vadd.f32 0.0, %v193
    %v195 = vpop.f32.mrf.mxu0
    %v196 = vpop.f32.mrf.mxu0
    %v197 = vadd.f32 0.0, %v196
    %v198 = vpop.f32.mrf.mxu0
    %199 = vdwg.mxu0
    %v200 = vadd.f32 %v120, %v194
    %v201 = vadd.f32 %v121, %v197
    %202 = vst.msk [vmem:[#allocation2] sm:$0xff] %vm59, %v200
    %203 = vst.msk [vmem:[#allocation2 + $0x8] sm:$0xff] %vm59, %v201
    // Predicated region
    $region26: #{tpu_custom_call.1} parent=1 // pred_check
      %p204 = pneg %p22
    $region27: #{tpu_custom_call.1} parent=1 // pred_check_branch
      %206 = sbr.rel (%p204) target = $region29
    $region28: #{tpu_custom_call.1} parent=1 // pred_region
      %v207 = vld [vmem:[#allocation2] sm:$0xff]
      %v208 = vld [vmem:[#allocation2 + $0x8] sm:$0xff]
      %v209 = vld [vmem:[%s4] sm:$0x1]
      %v211 = vlaneseq
      %v212 = vshrl.u32 %v211, 7
      %v213 = vsub.s32 0, %v212
      %v214 = vrot.slane %v209, %v213
      %v216 = vadd.f32 %v207, %v214
      %v217 = vadd.f32 %v208, %v214
      %218 = vst.msk [vmem:[#allocation3] sm:$0xff] %vm59, %v216
      %219 = vst.msk [vmem:[#allocation3 + $0x8] sm:$0xff] %vm59, %v217
    $region29: #{tpu_custom_call.1} parent=1 // pred_fallthru
      _
    // Predicated region
    $region30: #{tpu_custom_call.1} parent=1 // pred_check
      _
    $region31: #{tpu_custom_call.1} parent=1 // pred_check_branch
      %221 = sbr.rel (0) target = $region33
    $region32: #{tpu_custom_call.1} parent=1 // pred_region
      %s223 = ssub.s32 256, 256
      %224 = vsyncadd [#allocation4], %s223
      %s225 = sshll.u32 [#allocation3], 4
      %s226 = int_to_ptr.vmem [resolvable:$true] %s225
      %231 = dma.vmem_to_hbm [thread:$0]  %s226, 256, %s5, [#allocation4], 128, 128, 8
    $region33: #{tpu_custom_call.1} parent=1 // pred_fallthru
      _
    // Predicated region
    $region34: #{tpu_custom_call.1} parent=1 // pred_check
      _
    $region35: #{tpu_custom_call.1} parent=1 // pred_check_branch
      %233 = sbr.rel (0) target = $region37
    $region36: #{tpu_custom_call.1} parent=1 // pred_region
      %234 = dma.done [#allocation4], 256
    $region37: #{tpu_custom_call.1} parent=1 // pred_fallthru
      _
    %235 = vsyncpa [#allocation4], 1

</llo_original>
